<compile_context>
chip_gen: v5e
topology: v5e:2x2
jax: 0.10.0
libtpu: 0.0.40
codegen_flags: <defaults>
</compile_context>

<pallas_src>
import functools

import jax
import jax.numpy as jnp
from jax.experimental import pallas as pl
from jax.experimental.pallas import tpu as pltpu


def nn2_kernel(xt_ref, w1_ref, b1_ref, w2_ref, b2_ref, w3_ref, b3_ref,
               mean_ref, *, sigmoid_coeff):
    """MLP in transposed form: batch lives on the lane axis (lane-dense)."""
    xd = xt_ref.dtype

    # h1^T = relu(W1 @ x^T + b1)         (n_hidden, tile_n), f32 accumulation
    h1t = jax.lax.dot_general(
        w1_ref[...], xt_ref[...],
        dimension_numbers=(((1,), (0,)), ((), ())),
        preferred_element_type=jnp.float32)
    h1t = jnp.maximum(h1t + b1_ref[...], 0.0).astype(xd)

    # h2^T = relu(W2 @ h1^T + b2)        (n_hidden, tile_n), kept in f32
    h2t = jax.lax.dot_general(
        w2_ref[...], h1t,
        dimension_numbers=(((1,), (0,)), ((), ())),
        preferred_element_type=jnp.float32)
    h2t = jnp.maximum(h2t + b2_ref[...], 0.0)

    # dropout (eval mode) == identity

    # output row 0: M=1 matmul wastes an MXU weight-load/drain, so do it on the
    # VPU (broadcast multiply) + XLU (sublane reduce) instead.  (1, tile_n)
    out0 = jnp.sum(h2t * w3_ref[...], axis=0, keepdims=True) + b3_ref[...]

    if sigmoid_coeff > 0:
        mean = jax.nn.sigmoid(out0) * sigmoid_coeff
    else:
        mean = out0
    mean_ref[...] = mean.astype(mean_ref.dtype)   # lane-dense (1, tile_n) store


def nn2_forward(x, params, *, sigmoid_coeff=1.0, min_variance=1e-5,
                fixed_noise_std=0.1, max_var=0.1, tile_n=8192,
                stream_dtype=None, x_transposed=False):
    """NN2 forward.

    x: (N, n_inputs) — or (n_inputs, N) if x_transposed=True (avoids the
       wrapper-side transpose pass when the caller already has that layout).
    params: (w1, b1, w2, b2, w3, b3) in native PyTorch Linear (out, in) layout.
    stream_dtype: explicit low-precision streaming opt-in (e.g. jnp.bfloat16);
       None keeps x's dtype. Accumulation is always f32.
    """
    w1, b1, w2, b2, w3, b3 = params
    n_hidden = w1.shape[0]

    if x_transposed:
        xt = x
        n_inputs, n = x.shape
    else:
        n, n_inputs = x.shape
        xt = x.T                       # one-time layout pass; lane-dense blocks

    xd = jnp.dtype(stream_dtype) if stream_dtype is not None else xt.dtype
    xt = xt.astype(xd)

    # --- batch tiling -------------------------------------------------------
    # Multiple of 128 (lane-dense blocks); ensure >= 2 grid steps when the
    # batch allows it (both v7x TensorCores get work via the "parallel" axis);
    # never allocate a bigger block than the (rounded-up) batch needs.
    tile_n = max(128, (int(tile_n) // 128) * 128)
    half = pl.cdiv(pl.cdiv(n, 2), 128) * 128
    if half < tile_n:
        tile_n = max(128, half)
    n_ceil = pl.cdiv(n, 128) * 128
    tile_n = min(tile_n, n_ceil)
    num_tiles = pl.cdiv(n, tile_n)     # ragged last block handled by Pallas

    # Weights follow the streaming dtype (bf16 opt-in halves x/W HBM bytes and
    # MXU feed vregs); biases and the VPU output-layer weights stay f32.
    w1c = w1.astype(xd)
    w2c = w2.astype(xd)
    b1c = b1.reshape(n_hidden, 1).astype(jnp.float32)
    b2c = b2.reshape(n_hidden, 1).astype(jnp.float32)
    w3c = w3[0, :].reshape(n_hidden, 1).astype(jnp.float32)   # column, VPU use
    b3c = b3[0:1].reshape(1, 1).astype(jnp.float32)

    kernel = functools.partial(nn2_kernel, sigmoid_coeff=float(sigmoid_coeff))
    resident = lambda shape: pl.BlockSpec(shape, lambda i: (0,) * len(shape))

    mean_row = pl.pallas_call(
        kernel,
        out_shape=jax.ShapeDtypeStruct((1, n), jnp.float32),
        grid_spec=pltpu.PrefetchScalarGridSpec(
            num_scalar_prefetch=0,
            grid=(num_tiles,),
            in_specs=[
                pl.BlockSpec((n_inputs, tile_n), lambda i: (0, i)),  # x^T (streamed)
                resident((n_hidden, n_inputs)),                      # W1
                resident((n_hidden, 1)),                             # b1
                resident((n_hidden, n_hidden)),                      # W2
                resident((n_hidden, 1)),                             # b2
                resident((n_hidden, 1)),                             # W3 row 0 (col)
                resident((1, 1)),                                    # b3[0]
            ],
            out_specs=pl.BlockSpec((1, tile_n), lambda i: (0, i)),   # mean row
        ),
        compiler_params=pltpu.CompilerParams(
            dimension_semantics=("parallel",)),
    )(xt, w1c, b1c, w2c, b2c, w3c, b3c)

    mean = mean_row[0, :]
    # variance is a compile-time constant per row -> no kernel output needed.
    var_const = float(fixed_noise_std) ** 2 / float(max_var) + float(min_variance)
    variance = jnp.full((n,), var_const, jnp.float32)
    return mean, variance


def init_params(key, n_inputs, n_hidden):
    """PyTorch-style Linear init, native (out_features, in_features) layout."""
    def linear(key, fan_in, fan_out):
        kw, kb = jax.random.split(key)
        bound = 1.0 / jnp.sqrt(jnp.float32(fan_in))
        w = jax.random.uniform(kw, (fan_out, fan_in), jnp.float32, -bound, bound)
        b = jax.random.uniform(kb, (fan_out,), jnp.float32, -bound, bound)
        return w, b

    k1, k2, k3 = jax.random.split(key, 3)
    w1, b1 = linear(k1, n_inputs, n_hidden)
    w2, b2 = linear(k2, n_hidden, n_hidden)
    w3, b3 = linear(k3, n_hidden, 2)   # fixed_noise_std is not None -> 2 outputs
    return (w1, b1, w2, b2, w3, b3)


def nn2_reference(x, params, *, sigmoid_coeff=1.0, min_variance=1e-5,
                  fixed_noise_std=0.1, max_var=0.1):
    w1, b1, w2, b2, w3, b3 = params
    h1 = jnp.maximum(x @ w1.T + b1, 0.0)
    h2 = jnp.maximum(h1 @ w2.T + b2, 0.0)
    out = h2 @ w3.T + b3
    if sigmoid_coeff > 0:
        mean = jax.nn.sigmoid(out[:, 0]) * sigmoid_coeff
    else:
        mean = out[:, 0]
    var = jnp.full((x.shape[0],), fixed_noise_std ** 2 / max_var + min_variance,
                   jnp.float32)
    return mean, var


if __name__ == "__main__":
    n_batch, n_inputs, n_hidden = 300, 16, 32   # ragged batch, small shapes

    key = jax.random.PRNGKey(0)
    kx, kp = jax.random.split(key)
    x = jax.random.normal(kx, (n_batch, n_inputs), jnp.float32)
    params = init_params(kp, n_inputs, n_hidden)

    mean_ref, var_ref = nn2_reference(x, params)

    # Default tiling: tile_n is clamped to ~half the batch -> grid=(2,), with a
    # ragged (partial) last block handled by Pallas (no wrapper-side pad).
    mean, var = nn2_forward(x, params)
    jax.block_until_ready((mean, var))
    assert mean.shape == (n_batch,) and var.shape == (n_batch,)
    assert jnp.allclose(mean, mean_ref, atol=1e-5, rtol=1e-5)
    assert jnp.allclose(var, var_ref, atol=1e-6, rtol=1e-6)

    # Explicit small tile -> grid=(3,), last block partial.
    mean2, var2 = nn2_forward(x, params, tile_n=128)
    jax.block_until_ready((mean2, var2))
    assert jnp.allclose(mean2, mean_ref, atol=1e-5, rtol=1e-5)
    assert jnp.allclose(var2, var_ref, atol=1e-6, rtol=1e-6)

    # Caller-provided transposed layout (skips the wrapper transpose pass).
    mean3, _ = nn2_forward(x.T, params, x_transposed=True)
    jax.block_until_ready(mean3)
    assert jnp.allclose(mean3, mean_ref, atol=1e-5, rtol=1e-5)

    # Explicit bf16 streaming opt-in (f32 accumulation); mean is sigmoid-bounded.
    mean4, _ = nn2_forward(x, params, stream_dtype=jnp.bfloat16)
    jax.block_until_ready(mean4)
    assert jnp.allclose(mean4, mean_ref, atol=5e-2)

    print("KERNEL_OK")
</pallas_src>

<mosaic_0001>
module attributes {stable_mosaic.version = 11 : i64} {
  func.func @nn2_kernel(%arg0: i32, %arg1: memref<16x256xf32, #tpu.memory_space<vmem>>, %arg2: memref<32x16xf32, #tpu.memory_space<vmem>>, %arg3: memref<32x1xf32, #tpu.memory_space<vmem>>, %arg4: memref<32x32xf32, #tpu.memory_space<vmem>>, %arg5: memref<32x1xf32, #tpu.memory_space<vmem>>, %arg6: memref<32x1xf32, #tpu.memory_space<vmem>>, %arg7: memref<1x1xf32, #tpu.memory_space<vmem>>, %arg8: memref<1x256xf32, #tpu.memory_space<vmem>>) attributes {dimension_semantics = [#tpu.dimension_semantics<parallel>], iteration_bounds = array<i64: 2>, scalar_prefetch = 0 : i64, scratch_operands = 0 : i64, tpu.core_type = #tpu.core_type<tc>, window_params = [{transform_indices = @transform_0, window_bounds = array<i64: 16, 256>}, {pipeline_mode = #tpu.pipeline_mode<synchronous>, transform_indices = @transform_1, window_bounds = array<i64: 32, 16>}, {pipeline_mode = #tpu.pipeline_mode<synchronous>, transform_indices = @transform_2, window_bounds = array<i64: 32, 1>}, {pipeline_mode = #tpu.pipeline_mode<synchronous>, transform_indices = @transform_3, window_bounds = array<i64: 32, 32>}, {pipeline_mode = #tpu.pipeline_mode<synchronous>, transform_indices = @transform_4, window_bounds = array<i64: 32, 1>}, {pipeline_mode = #tpu.pipeline_mode<synchronous>, transform_indices = @transform_5, window_bounds = array<i64: 32, 1>}, {pipeline_mode = #tpu.pipeline_mode<synchronous>, transform_indices = @transform_6, window_bounds = array<i64: 1, 1>}, {transform_indices = @transform_7, window_bounds = array<i64: 1, 256>}]} {
    %c0 = arith.constant 0 : index
    %c0_0 = arith.constant 0 : index
    %0 = vector.load %arg2[%c0, %c0_0] : memref<32x16xf32, #tpu.memory_space<vmem>>, vector<32x16xf32>
    %c0_1 = arith.constant 0 : index
    %c0_2 = arith.constant 0 : index
    %1 = vector.load %arg1[%c0_1, %c0_2] : memref<16x256xf32, #tpu.memory_space<vmem>>, vector<16x256xf32>
    %cst = arith.constant dense<0.000000e+00> : vector<32x256xf32>
    %2 = tpu.matmul %0, %1, %cst {dimension_numbers = #tpu.dot_dimension_numbers<[1], [0], [0], [1], [0, 0, 1, 1], [], []>} : vector<32x16xf32>, vector<16x256xf32>, vector<32x256xf32> -> vector<32x256xf32>
    %c0_3 = arith.constant 0 : index
    %c0_4 = arith.constant 0 : index
    %3 = vector.load %arg3[%c0_3, %c0_4] : memref<32x1xf32, #tpu.memory_space<vmem>>, vector<32x1xf32>
    %4 = vector.broadcast %3 : vector<32x1xf32> to vector<32x256xf32>
    %5 = arith.addf %2, %4 : vector<32x256xf32>
    %cst_5 = arith.constant 0.000000e+00 : f32
    %6 = vector.broadcast %cst_5 : f32 to vector<32x256xf32>
    %7 = arith.maximumf %5, %6 : vector<32x256xf32>
    %c0_6 = arith.constant 0 : index
    %c0_7 = arith.constant 0 : index
    %8 = vector.load %arg4[%c0_6, %c0_7] : memref<32x32xf32, #tpu.memory_space<vmem>>, vector<32x32xf32>
    %cst_8 = arith.constant dense<0.000000e+00> : vector<32x256xf32>
    %9 = tpu.matmul %8, %7, %cst_8 {dimension_numbers = #tpu.dot_dimension_numbers<[1], [0], [0], [1], [0, 0, 1, 1], [], []>} : vector<32x32xf32>, vector<32x256xf32>, vector<32x256xf32> -> vector<32x256xf32>
    %c0_9 = arith.constant 0 : index
    %c0_10 = arith.constant 0 : index
    %10 = vector.load %arg5[%c0_9, %c0_10] : memref<32x1xf32, #tpu.memory_space<vmem>>, vector<32x1xf32>
    %11 = vector.broadcast %10 : vector<32x1xf32> to vector<32x256xf32>
    %12 = arith.addf %9, %11 : vector<32x256xf32>
    %cst_11 = arith.constant 0.000000e+00 : f32
    %13 = vector.broadcast %cst_11 : f32 to vector<32x256xf32>
    %14 = arith.maximumf %12, %13 : vector<32x256xf32>
    %c0_12 = arith.constant 0 : index
    %c0_13 = arith.constant 0 : index
    %15 = vector.load %arg6[%c0_12, %c0_13] : memref<32x1xf32, #tpu.memory_space<vmem>>, vector<32x1xf32>
    %16 = vector.broadcast %15 : vector<32x1xf32> to vector<32x256xf32>
    %17 = arith.mulf %14, %16 : vector<32x256xf32>
    %cst_14 = arith.constant dense<0.000000e+00> : vector<256xf32>
    %18 = vector.multi_reduction <add>, %17, %cst_14 [0] : vector<32x256xf32> to vector<256xf32>
    %19 = vector.shape_cast %18 : vector<256xf32> to vector<1x256xf32>
    %c0_15 = arith.constant 0 : index
    %c0_16 = arith.constant 0 : index
    %20 = vector.load %arg7[%c0_15, %c0_16] : memref<1x1xf32, #tpu.memory_space<vmem>>, vector<1x1xf32>
    %21 = vector.broadcast %20 : vector<1x1xf32> to vector<1x256xf32>
    %22 = arith.addf %19, %21 : vector<1x256xf32>
    %23 = arith.negf %22 : vector<1x256xf32>
    %24 = math.exp %23 : vector<1x256xf32>
    %cst_17 = arith.constant 1.000000e+00 : f32
    %25 = vector.broadcast %cst_17 : f32 to vector<1x256xf32>
    %26 = arith.addf %25, %24 : vector<1x256xf32>
    %27 = arith.divf %25, %26 : vector<1x256xf32>
    %cst_18 = arith.constant 1.000000e+00 : f32
    %28 = vector.broadcast %cst_18 : f32 to vector<1x256xf32>
    %29 = arith.mulf %27, %28 : vector<1x256xf32>
    %c0_19 = arith.constant 0 : index
    %c0_20 = arith.constant 0 : index
    %30 = vector.load %arg8[%c0_19, %c0_20] : memref<1x256xf32, #tpu.memory_space<vmem>>, vector<1x256xf32>
    tpu.vector_store %arg8[%c0_19, %c0_20], %29 {strides = array<i32>} : memref<1x256xf32, #tpu.memory_space<vmem>>, vector<1x256xf32>,
    return
  }
  func.func @transform_0(%arg0: i32) -> (i32, i32) {
    %c0_i32 = arith.constant 0 : i32
    %c0_i32_0 = arith.constant 0 : i32
    return %c0_i32, %arg0 : i32, i32
  }
  func.func @transform_1(%arg0: i32) -> (i32, i32) {
    %c0_i32 = arith.constant 0 : i32
    %c0_i32_0 = arith.constant 0 : i32
    %c0_i32_1 = arith.constant 0 : i32
    return %c0_i32, %c0_i32_0 : i32, i32
  }
  func.func @transform_2(%arg0: i32) -> (i32, i32) {
    %c0_i32 = arith.constant 0 : i32
    %c0_i32_0 = arith.constant 0 : i32
    %c0_i32_1 = arith.constant 0 : i32
    return %c0_i32, %c0_i32_0 : i32, i32
  }
  func.func @transform_3(%arg0: i32) -> (i32, i32) {
    %c0_i32 = arith.constant 0 : i32
    %c0_i32_0 = arith.constant 0 : i32
    %c0_i32_1 = arith.constant 0 : i32
    return %c0_i32, %c0_i32_0 : i32, i32
  }
  func.func @transform_4(%arg0: i32) -> (i32, i32) {
    %c0_i32 = arith.constant 0 : i32
    %c0_i32_0 = arith.constant 0 : i32
    %c0_i32_1 = arith.constant 0 : i32
    return %c0_i32, %c0_i32_0 : i32, i32
  }
  func.func @transform_5(%arg0: i32) -> (i32, i32) {
    %c0_i32 = arith.constant 0 : i32
    %c0_i32_0 = arith.constant 0 : i32
    %c0_i32_1 = arith.constant 0 : i32
    return %c0_i32, %c0_i32_0 : i32, i32
  }
  func.func @transform_6(%arg0: i32) -> (i32, i32) {
    %c0_i32 = arith.constant 0 : i32
    %c0_i32_0 = arith.constant 0 : i32
    %c0_i32_1 = arith.constant 0 : i32
    return %c0_i32, %c0_i32_0 : i32, i32
  }
  func.func @transform_7(%arg0: i32) -> (i32, i32) {
    %c0_i32 = arith.constant 0 : i32
    %c0_i32_0 = arith.constant 0 : i32
    return %c0_i32, %arg0 : i32, i32
  }
}

</mosaic_0001>

<llo_original>
// kernel: tpu_custom_call.1
$region0: #{tpu_custom_call.1}
  #allocation0 [shape = 'u32[]', space=smem, size = 0x4, offset = 0x4, fixed_abs, tag = 'smem constant byte address 0x4 - core index']
  #allocation1 [shape = 'u32[72,128]{1,0:T(1,128)}', space=vmem, size = 0x9000, scoped, tag = 'internal scratch']
  #allocation2 [shape = 'f32[1,1]{1,0:T(1,128)S(1)}', space=vmem, size = 0x200, scoped, tag = 'scoped memory for tpu_custom_call.1']
  %s0 = inlined_call_operand.vmem [shape: f32[16,300], index: 0, kind: input, shape index: {}]
  %s1 = inlined_call_operand.vmem [shape: f32[32,16], index: 1, kind: input, shape index: {}]
  %s2 = inlined_call_operand.vmem [shape: f32[32,1], index: 2, kind: input, shape index: {}]
  %s3 = inlined_call_operand.vmem [shape: f32[32,32], index: 3, kind: input, shape index: {}]
  %s4 = inlined_call_operand.vmem [shape: f32[32,1], index: 4, kind: input, shape index: {}]
  %s5 = inlined_call_operand.vmem [shape: f32[32,1], index: 5, kind: input, shape index: {}]
  %s6 = inlined_call_operand.<no memory space> [shape: f32[1,1], index: 6, kind: input, shape index: {}]
  %s7 = inlined_call_operand.hbm [shape: f32[1,300], index: 7, kind: output, shape index: {}]
  %s8 = sld [smem:[#allocation0]]
  $region127: #{tpu_custom_call.1} parent=0
    _
  %s10 = ssub.s32 1, %s8
  %s11 = scalar_select 0, %s10, %s8
  %v12 = vstv %s6
  %13 = vst [vmem:[#allocation2] sm:$0x1] %v12
  $region1: #{tpu_custom_call.1} parent=0
    #allocation3 [shape = 'u8[32768]{0}', space=vmem, size = 0x8000, scoped, tag = 'input window, operand 0']
    #allocation4 [shape = 'u8[2048]{0}', space=vmem, size = 0x800, scoped, tag = 'output window, operand 0']
    #allocation5 [shape = 's32[2]{0}', space=sflag, size = 0x8, scoped, tag = 'scoped memory for tpu_custom_call.1']
    %14 = vsyncpa [#allocation5], 0
    %s15 = scalar_lea.sflag [#allocation5], 1
    %16 = vsyncpa %s15, 0
    loop: start=0, step=1, limit=4
    $region2: #{tpu_custom_call.1} parent=1 // loop_pre_header
      _
    $region3: #{tpu_custom_call.1} parent=1 // loop_header
      %s18 = sphi 0, %s22
      %p19 = scmp.ge.s32.totalorder %s18, 4
      %s28 = sphi 0, %s30
      %s31 = sphi 0, %s28
      %s32 = sphi 0, %s31
      %s48 = sphi 0, %s32
      %s52 = sphi 0, %s52
      %s54 = sphi 0, %s52
      %s55 = sphi 0, %s54
      %s69 = sphi 0, %s55
      %s73 = sphi 0, %s73
      %s75 = sphi 0, %s73
      %s76 = sphi 0, %s75
      %s90 = sphi 0, %s76
      %s94 = sphi 0, %s94
      %s96 = sphi 0, %s94
      %s97 = sphi 0, %s96
      %s111 = sphi 0, %s97
      %s115 = sphi 0, %s115
      %s117 = sphi 0, %s115
      %s118 = sphi 0, %s117
      %s132 = sphi 0, %s118
      %s136 = sphi 0, %s136
      %s138 = sphi 0, %s136
      %s139 = sphi 0, %s138
      %s153 = sphi 0, %s139
      %s157 = sphi 0, %s157
      %s159 = sphi 0, %s157
      %s160 = sphi 0, %s159
      %s174 = sphi 0, %s160
      %s180 = sphi 0, %s182
      %s183 = sphi 0, %s180
      %s184 = sphi 0, %s183
      %s200 = sphi 0, %s184
    $region4: #{tpu_custom_call.1} parent=1 // loop_header_branch
      %21 = sbr.rel (%p19) target = $region8
    $region5: #{tpu_custom_call.1} parent=1 // loop_body
      %s23 = ssub.s32 %s18, 1
      %s24 = ssub.s32 %s18, 2
      %s25 = sadd.s32 %s18, 1
      %s26 = ssub.s32 %s18, %s25
      %p27 = scmp.eq.s32.totalorder %s26, 0
      %s29 = sadd.s32 %s28, 1
      %s30 = scalar_select %p27, %s28, %s29
      %p33 = pneg %p27
      %p34 = scmp.eq.s32.totalorder %s18, 1
      %p35 = por %p33, %p34
      %p36 = scmp.ne.s32.totalorder %s28, %s31
      %p37 = scmp.eq.s32.totalorder %s18, 0
      %p38 = por %p36, %p37
      %p39 = scmp.ne.s32.totalorder %s28, %s31
      %p40 = scmp.eq.s32.totalorder %s23, 1
      %p41 = por %p39, %p40
      %p42 = scmp.ne.s32.totalorder %s31, %s32
      %p43 = scmp.eq.s32.totalorder %s23, 0
      %p44 = por %p42, %p43
      %p45 = scmp.ne.s32.totalorder %s31, %s32
      %p46 = scmp.eq.s32.totalorder %s24, 1
      %p47 = por %p45, %p46
      %p49 = scmp.ne.s32.totalorder %s32, %s48
      %p50 = scmp.eq.s32.totalorder %s24, 0
      %p51 = por %p49, %p50
      %s53 = sadd.s32 %s52, 1
      %p56 = scmp.eq.s32.totalorder %s18, 1
      %p57 = scmp.ne.s32.totalorder %s52, %s54
      %p58 = scmp.eq.s32.totalorder %s18, 0
      %p59 = por %p57, %p58
      %p60 = scmp.ne.s32.totalorder %s52, %s54
      %p61 = scmp.eq.s32.totalorder %s23, 1
      %p62 = por %p60, %p61
      %p63 = scmp.ne.s32.totalorder %s54, %s55
      %p64 = scmp.eq.s32.totalorder %s23, 0
      %p65 = por %p63, %p64
      %p66 = scmp.ne.s32.totalorder %s54, %s55
      %p67 = scmp.eq.s32.totalorder %s24, 1
      %p68 = por %p66, %p67
      %p70 = scmp.ne.s32.totalorder %s55, %s69
      %p71 = scmp.eq.s32.totalorder %s24, 0
      %p72 = por %p70, %p71
      %s74 = sadd.s32 %s73, 1
      %p77 = scmp.eq.s32.totalorder %s18, 1
      %p78 = scmp.ne.s32.totalorder %s73, %s75
      %p79 = scmp.eq.s32.totalorder %s18, 0
      %p80 = por %p78, %p79
      %p81 = scmp.ne.s32.totalorder %s73, %s75
      %p82 = scmp.eq.s32.totalorder %s23, 1
      %p83 = por %p81, %p82
      %p84 = scmp.ne.s32.totalorder %s75, %s76
      %p85 = scmp.eq.s32.totalorder %s23, 0
      %p86 = por %p84, %p85
      %p87 = scmp.ne.s32.totalorder %s75, %s76
      %p88 = scmp.eq.s32.totalorder %s24, 1
      %p89 = por %p87, %p88
      %p91 = scmp.ne.s32.totalorder %s76, %s90
      %p92 = scmp.eq.s32.totalorder %s24, 0
      %p93 = por %p91, %p92
      %s95 = sadd.s32 %s94, 1
      %p98 = scmp.eq.s32.totalorder %s18, 1
      %p99 = scmp.ne.s32.totalorder %s94, %s96
      %p100 = scmp.eq.s32.totalorder %s18, 0
      %p101 = por %p99, %p100
      %p102 = scmp.ne.s32.totalorder %s94, %s96
      %p103 = scmp.eq.s32.totalorder %s23, 1
      %p104 = por %p102, %p103
      %p105 = scmp.ne.s32.totalorder %s96, %s97
      %p106 = scmp.eq.s32.totalorder %s23, 0
      %p107 = por %p105, %p106
      %p108 = scmp.ne.s32.totalorder %s96, %s97
      %p109 = scmp.eq.s32.totalorder %s24, 1
      %p110 = por %p108, %p109
      %p112 = scmp.ne.s32.totalorder %s97, %s111
      %p113 = scmp.eq.s32.totalorder %s24, 0
      %p114 = por %p112, %p113
      %s116 = sadd.s32 %s115, 1
      %p119 = scmp.eq.s32.totalorder %s18, 1
      %p120 = scmp.ne.s32.totalorder %s115, %s117
      %p121 = scmp.eq.s32.totalorder %s18, 0
      %p122 = por %p120, %p121
      %p123 = scmp.ne.s32.totalorder %s115, %s117
      %p124 = scmp.eq.s32.totalorder %s23, 1
      %p125 = por %p123, %p124
      %p126 = scmp.ne.s32.totalorder %s117, %s118
      %p127 = scmp.eq.s32.totalorder %s23, 0
      %p128 = por %p126, %p127
      %p129 = scmp.ne.s32.totalorder %s117, %s118
      %p130 = scmp.eq.s32.totalorder %s24, 1
      %p131 = por %p129, %p130
      %p133 = scmp.ne.s32.totalorder %s118, %s132
      %p134 = scmp.eq.s32.totalorder %s24, 0
      %p135 = por %p133, %p134
      %s137 = sadd.s32 %s136, 1
      %p140 = scmp.eq.s32.totalorder %s18, 1
      %p141 = scmp.ne.s32.totalorder %s136, %s138
      %p142 = scmp.eq.s32.totalorder %s18, 0
      %p143 = por %p141, %p142
      %p144 = scmp.ne.s32.totalorder %s136, %s138
      %p145 = scmp.eq.s32.totalorder %s23, 1
      %p146 = por %p144, %p145
      %p147 = scmp.ne.s32.totalorder %s138, %s139
      %p148 = scmp.eq.s32.totalorder %s23, 0
      %p149 = por %p147, %p148
      %p150 = scmp.ne.s32.totalorder %s138, %s139
      %p151 = scmp.eq.s32.totalorder %s24, 1
      %p152 = por %p150, %p151
      %p154 = scmp.ne.s32.totalorder %s139, %s153
      %p155 = scmp.eq.s32.totalorder %s24, 0
      %p156 = por %p154, %p155
      %s158 = sadd.s32 %s157, 1
      %p161 = scmp.eq.s32.totalorder %s18, 1
      %p162 = scmp.ne.s32.totalorder %s157, %s159
      %p163 = scmp.eq.s32.totalorder %s18, 0
      %p164 = por %p162, %p163
      %p165 = scmp.ne.s32.totalorder %s157, %s159
      %p166 = scmp.eq.s32.totalorder %s23, 1
      %p167 = por %p165, %p166
      %p168 = scmp.ne.s32.totalorder %s159, %s160
      %p169 = scmp.eq.s32.totalorder %s23, 0
      %p170 = por %p168, %p169
      %p171 = scmp.ne.s32.totalorder %s159, %s160
      %p172 = scmp.eq.s32.totalorder %s24, 1
      %p173 = por %p171, %p172
      %p175 = scmp.ne.s32.totalorder %s160, %s174
      %p176 = scmp.eq.s32.totalorder %s24, 0
      %p177 = por %p175, %p176
      %s178 = ssub.s32 %s18, %s25
      %p179 = scmp.eq.s32.totalorder %s178, 0
      %s181 = sadd.s32 %s180, 1
      %s182 = scalar_select %p179, %s180, %s181
      %p185 = pneg %p179
      %p186 = scmp.eq.s32.totalorder %s18, 1
      %p187 = por %p185, %p186
      %p188 = scmp.ne.s32.totalorder %s180, %s183
      %p189 = scmp.eq.s32.totalorder %s18, 0
      %p190 = por %p188, %p189
      %p191 = scmp.ne.s32.totalorder %s180, %s183
      %p192 = scmp.eq.s32.totalorder %s23, 1
      %p193 = por %p191, %p192
      %p194 = scmp.ne.s32.totalorder %s183, %s184
      %p195 = scmp.eq.s32.totalorder %s23, 0
      %p196 = por %p194, %p195
      %p197 = scmp.ne.s32.totalorder %s183, %s184
      %p198 = scmp.eq.s32.totalorder %s24, 1
      %p199 = por %p197, %p198
      %p201 = scmp.ne.s32.totalorder %s184, %s200
      %p202 = scmp.eq.s32.totalorder %s24, 0
      %p203 = por %p201, %p202
      %p204 = scmp.le.s32.totalorder 1, %s18
      %p205 = scmp.lt.s32.totalorder %s18, 3
      %p206 = pnand %p204, %p205
      %p207 = pneg %p206
      // Predicated region
      $region9: #{tpu_custom_call.1} parent=5 // pred_check
        _
      $region10: #{tpu_custom_call.1} parent=5 // pred_check_branch
        %209 = sbr.rel (%p206) target = $region12
      $region11: #{tpu_custom_call.1} parent=5 // pred_region
        %s210 = ssub.s32 %s18, 1
        // Predicated region
        $region13: #{tpu_custom_call.1} parent=11 // pred_check
          %p211 = pneg %p65
        $region14: #{tpu_custom_call.1} parent=11 // pred_check_branch
          %213 = sbr.rel (%p211) target = $region16
        $region15: #{tpu_custom_call.1} parent=11 // pred_region
          _
        $region16: #{tpu_custom_call.1} parent=11 // pred_fallthru
          _
        // Predicated region
        $region17: #{tpu_custom_call.1} parent=11 // pred_check
          %p214 = pneg %p86
        $region18: #{tpu_custom_call.1} parent=11 // pred_check_branch
          %216 = sbr.rel (%p214) target = $region20
        $region19: #{tpu_custom_call.1} parent=11 // pred_region
          _
        $region20: #{tpu_custom_call.1} parent=11 // pred_fallthru
          _
        // Predicated region
        $region21: #{tpu_custom_call.1} parent=11 // pred_check
          %p217 = pneg %p107
        $region22: #{tpu_custom_call.1} parent=11 // pred_check_branch
          %219 = sbr.rel (%p217) target = $region24
        $region23: #{tpu_custom_call.1} parent=11 // pred_region
          _
        $region24: #{tpu_custom_call.1} parent=11 // pred_fallthru
          _
        // Predicated region
        $region25: #{tpu_custom_call.1} parent=11 // pred_check
          %p220 = pneg %p128
        $region26: #{tpu_custom_call.1} parent=11 // pred_check_branch
          %222 = sbr.rel (%p220) target = $region28
        $region27: #{tpu_custom_call.1} parent=11 // pred_region
          _
        $region28: #{tpu_custom_call.1} parent=11 // pred_fallthru
          _
        // Predicated region
        $region29: #{tpu_custom_call.1} parent=11 // pred_check
          %p223 = pneg %p149
        $region30: #{tpu_custom_call.1} parent=11 // pred_check_branch
          %225 = sbr.rel (%p223) target = $region32
        $region31: #{tpu_custom_call.1} parent=11 // pred_region
          _
        $region32: #{tpu_custom_call.1} parent=11 // pred_fallthru
          _
        // Predicated region
        $region33: #{tpu_custom_call.1} parent=11 // pred_check
          %p226 = pneg %p170
        $region34: #{tpu_custom_call.1} parent=11 // pred_check_branch
          %228 = sbr.rel (%p226) target = $region36
        $region35: #{tpu_custom_call.1} parent=11 // pred_region
          _
        $region36: #{tpu_custom_call.1} parent=11 // pred_fallthru
          _
      $region12: #{tpu_custom_call.1} parent=5 // pred_fallthru
        _
      %p229 = scmp.lt.s32.totalorder %s18, 2
      // Predicated region
      $region37: #{tpu_custom_call.1} parent=5 // pred_check
        %p230 = pneg %p229
      $region38: #{tpu_custom_call.1} parent=5 // pred_check_branch
        %232 = sbr.rel (%p230) target = $region40
      $region39: #{tpu_custom_call.1} parent=5 // pred_region
        // Predicated region
        $region41: #{tpu_custom_call.1} parent=39 // pred_check
          %p233 = pneg %p38
        $region42: #{tpu_custom_call.1} parent=39 // pred_check_branch
          %235 = sbr.rel (%p233) target = $region44
        $region43: #{tpu_custom_call.1} parent=39 // pred_region
          %s236 = sand.u32 %s28, 1
          %s237 = sand.u32 %s28, 1
          %s238 = smul.addr %s237, 32
          %s239 = scalar_lea.vmem [#allocation3], %s238
          %s240 = smul.u32 2, %s18
          %s241 = ssub.s32 3, %s240
          %p242 = scmp.lt.s32.totalorder %s241, 2
          %s243 = scalar_select %p242, %s241, 2
          %s244 = smul.u32 16, %s243
          %p245 = scmp.ne.s32.totalorder 0, %s244
          %s246 = smul.addr %s240, 8
          %s247 = scalar_lea.vmem %s0, %s246
          %s248 = smul.u32 %s243, 8
          // Predicated region
          $region45: #{tpu_custom_call.1} parent=43 // pred_check
            %p249 = pneg %p245
          $region46: #{tpu_custom_call.1} parent=43 // pred_check_branch
            %251 = sbr.rel (%p249) target = $region48
          $region47: #{tpu_custom_call.1} parent=43 // pred_region
            %p252 = scmp.lt.u32.totalorder %s248, 8
            %p253 = pneg %p252
            // Predicated region
            $region49: #{tpu_custom_call.1} parent=47 // pred_check
              _
            $region50: #{tpu_custom_call.1} parent=47 // pred_check_branch
              %255 = sbr.rel (%p252) target = $region52
            $region51: #{tpu_custom_call.1} parent=47 // pred_region
              %s273 = sand.u32 %s248, 7
              %p274 = scmp.eq.s32.totalorder %s273, 0
              // Predicated region
              $region64: #{tpu_custom_call.1} parent=51 // pred_check
                %p275 = pneg %p274
              $region65: #{tpu_custom_call.1} parent=51 // pred_check_branch
                %277 = sbr.rel (%p275) target = $region67
              $region66: #{tpu_custom_call.1} parent=51 // pred_region
                %s278 = sshrl.u32 %s248, 3
                %s279 = sshrl.u32 %s278, 4
                // While loop
                $region68: #{tpu_custom_call.1} parent=66 // loop_pre_header
                  _
                $region69: #{tpu_custom_call.1} parent=66 // loop_header
                  %s281 = sphi 0, %s283
                  %p282 = scmp.ge.s32.totalorder %s281, %s279
                  %s286 = sphi 0, %s355
                  %s287 = sphi %s247, %s358
                  %s288 = sphi %s239, %s359
                $region70: #{tpu_custom_call.1} parent=66 // loop_header_branch
                  %285 = sbr.rel (%p282) target = $region74
                $region71: #{tpu_custom_call.1} parent=66 // loop_body
                  %v289 = vld [vmem:[%s287] sm:$0xff]
                  %290 = vst [vmem:[%s288] sm:$0xff] %v289
                  %v291 = vld [vmem:[%s287 + $0x8] sm:$0xff]
                  %292 = vst [vmem:[%s288 + $0x8] sm:$0xff] %v291
                  %v293 = vld [vmem:[%s287 + $0x10] sm:$0xff]
                  %294 = vst [vmem:[%s288 + $0x10] sm:$0xff] %v293
                  %v295 = vld [vmem:[%s287 + $0x18] sm:$0xff]
                  %296 = vst [vmem:[%s288 + $0x18] sm:$0xff] %v295
                  %v297 = vld [vmem:[%s287 + $0x20] sm:$0xff]
                  %298 = vst [vmem:[%s288 + $0x20] sm:$0xff] %v297
                  %v299 = vld [vmem:[%s287 + $0x28] sm:$0xff]
                  %300 = vst [vmem:[%s288 + $0x28] sm:$0xff] %v299
                  %v301 = vld [vmem:[%s287 + $0x30] sm:$0xff]
                  %302 = vst [vmem:[%s288 + $0x30] sm:$0xff] %v301
                  %v303 = vld [vmem:[%s287 + $0x38] sm:$0xff]
                  %304 = vst [vmem:[%s288 + $0x38] sm:$0xff] %v303
                  %v305 = vld [vmem:[%s287 + $0x40] sm:$0xff]
                  %306 = vst [vmem:[%s288 + $0x40] sm:$0xff] %v305
                  %v307 = vld [vmem:[%s287 + $0x48] sm:$0xff]
                  %308 = vst [vmem:[%s288 + $0x48] sm:$0xff] %v307
                  %v309 = vld [vmem:[%s287 + $0x50] sm:$0xff]
                  %310 = vst [vmem:[%s288 + $0x50] sm:$0xff] %v309
                  %v311 = vld [vmem:[%s287 + $0x58] sm:$0xff]
                  %312 = vst [vmem:[%s288 + $0x58] sm:$0xff] %v311
                  %v313 = vld [vmem:[%s287 + $0x60] sm:$0xff]
                  %314 = vst [vmem:[%s288 + $0x60] sm:$0xff] %v313
                  %v315 = vld [vmem:[%s287 + $0x68] sm:$0xff]
                  %316 = vst [vmem:[%s288 + $0x68] sm:$0xff] %v315
                  %v317 = vld [vmem:[%s287 + $0x70] sm:$0xff]
                  %318 = vst [vmem:[%s288 + $0x70] sm:$0xff] %v317
                  %v319 = vld [vmem:[%s287 + $0x78] sm:$0xff]
                  %320 = vst [vmem:[%s288 + $0x78] sm:$0xff] %v319
                  %v321 = vld [vmem:[%s287 + $0x18] sm:$0xff]
                  %322 = vst [vmem:[%s288 + $0x10] sm:$0xff] %v321
                  %v323 = vld [vmem:[%s287 + $0x20] sm:$0xff]
                  %324 = vst [vmem:[%s288 + $0x18] sm:$0xff] %v323
                  %v325 = vld [vmem:[%s287 + $0x28] sm:$0xff]
                  %326 = vst [vmem:[%s288 + $0x20] sm:$0xff] %v325
                  %v327 = vld [vmem:[%s287 + $0x30] sm:$0xff]
                  %328 = vst [vmem:[%s288 + $0x28] sm:$0xff] %v327
                  %v329 = vld [vmem:[%s287 + $0x38] sm:$0xff]
                  %330 = vst [vmem:[%s288 + $0x30] sm:$0xff] %v329
                  %v331 = vld [vmem:[%s287 + $0x40] sm:$0xff]
                  %332 = vst [vmem:[%s288 + $0x38] sm:$0xff] %v331
                  %v333 = vld [vmem:[%s287 + $0x48] sm:$0xff]
                  %334 = vst [vmem:[%s288 + $0x40] sm:$0xff] %v333
                  %v335 = vld [vmem:[%s287 + $0x50] sm:$0xff]
                  %336 = vst [vmem:[%s288 + $0x48] sm:$0xff] %v335
                  %v337 = vld [vmem:[%s287 + $0x58] sm:$0xff]
                  %338 = vst [vmem:[%s288 + $0x50] sm:$0xff] %v337
                  %v339 = vld [vmem:[%s287 + $0x60] sm:$0xff]
                  %340 = vst [vmem:[%s288 + $0x58] sm:$0xff] %v339
                  %v341 = vld [vmem:[%s287 + $0x68] sm:$0xff]
                  %342 = vst [vmem:[%s288 + $0x60] sm:$0xff] %v341
                  %v343 = vld [vmem:[%s287 + $0x70] sm:$0xff]
                  %344 = vst [vmem:[%s288 + $0x68] sm:$0xff] %v343
                  %v345 = vld [vmem:[%s287 + $0x78] sm:$0xff]
                  %346 = vst [vmem:[%s288 + $0x70] sm:$0xff] %v345
                  %v347 = vld [vmem:[%s287 + $0x80] sm:$0xff]
                  %348 = vst [vmem:[%s288 + $0x78] sm:$0xff] %v347
                  %v349 = vld [vmem:[%s287 + $0x88] sm:$0xff]
                  %350 = vst [vmem:[%s288 + $0x80] sm:$0xff] %v349
                  %v351 = vld [vmem:[%s287 + $0x90] sm:$0xff]
                  %352 = vst [vmem:[%s288 + $0x88] sm:$0xff] %v351
                  %s353 = sadd.s32 1, %s286
                  %p354 = scmp.ge.s32.totalorder %s353, %s279
                  %s355 = scalar_select %p354, 0, %s353
                  %s356 = smul.u32 %s355, 128
                  %s357 = smul.u32 %s355, 128
                  %s358 = scalar_lea.vmem %s247, %s356
                  %s359 = scalar_lea.vmem %s239, %s357 [#allocation3]
                $region72: #{tpu_custom_call.1} parent=66 // loop_footer
                  %s283 = sadd.s32 %s281, 1
                $region73: #{tpu_custom_call.1} parent=66 // loop_footer_branch
                  %280 = sbr.rel target = $region69
                $region74: #{tpu_custom_call.1} parent=66 // loop_exit
                  _
                %s360 = sshrl.u32 %s278, 4
                %s361 = sand.u32 %s278, 15
                %s362 = smul.u32 %s360, 16
                %s363 = smul.u32 8, %s362
                %s364 = scalar_lea.vmem %s247, %s363
                %s365 = smul.u32 8, %s362
                %s366 = scalar_lea.vmem %s239, %s365 [#allocation3]
                // While loop
                $region75: #{tpu_custom_call.1} parent=66 // loop_pre_header
                  _
                $region76: #{tpu_custom_call.1} parent=66 // loop_header
                  %s368 = sphi 0, %s370
                  %p369 = scmp.ge.s32.totalorder %s368, %s361
                  %s373 = sphi 0, %s382
                  %s374 = sphi %s364, %s385
                  %s375 = sphi %s366, %s386
                $region77: #{tpu_custom_call.1} parent=66 // loop_header_branch
                  %372 = sbr.rel (%p369) target = $region81
                $region78: #{tpu_custom_call.1} parent=66 // loop_body
                  %v376 = vld [vmem:[%s374] sm:$0xff]
                  %377 = vst [vmem:[%s375] sm:$0xff] %v376
                  %v378 = vld [vmem:[%s374 + $0x18] sm:$0xff]
                  %379 = vst [vmem:[%s375 + $0x10] sm:$0xff] %v378
                  %s380 = sadd.s32 1, %s373
                  %p381 = scmp.ge.s32.totalorder %s380, %s361
                  %s382 = scalar_select %p381, 0, %s380
                  %s383 = smul.u32 %s382, 8
                  %s384 = smul.u32 %s382, 8
                  %s385 = scalar_lea.vmem %s364, %s383
                  %s386 = scalar_lea.vmem %s366, %s384 [#allocation3]
                $region79: #{tpu_custom_call.1} parent=66 // loop_footer
                  %s370 = sadd.s32 %s368, 1
                $region80: #{tpu_custom_call.1} parent=66 // loop_footer_branch
                  %367 = sbr.rel target = $region76
                $region81: #{tpu_custom_call.1} parent=66 // loop_exit
                  _
              $region67: #{tpu_custom_call.1} parent=51 // pred_fallthru
                _
              %p387 = pneg %p274
              // Predicated region
              $region82: #{tpu_custom_call.1} parent=51 // pred_check
                _
              $region83: #{tpu_custom_call.1} parent=51 // pred_check_branch
                %389 = sbr.rel (%p274) target = $region85
              $region84: #{tpu_custom_call.1} parent=51 // pred_region
                %s390 = sand.u32 %s248, 7
                %s391 = ssub.s32 %s248, %s390
                %s392 = scalar_lea.vmem %s247, %s391
                %s393 = ssub.s32 %s248, %s390
                %s394 = scalar_lea.vmem %s239, %s393 [#allocation3]
                %s395 = sshrl.u32 %s248, 3
                %s396 = sshrl.u32 %s395, 4
                // While loop
                $region86: #{tpu_custom_call.1} parent=84 // loop_pre_header
                  _
                $region87: #{tpu_custom_call.1} parent=84 // loop_header
                  %s398 = sphi 0, %s400
                  %p399 = scmp.ge.s32.totalorder %s398, %s396
                  %s403 = sphi 0, %s472
                  %s404 = sphi %s247, %s475
                  %s405 = sphi %s239, %s476
                $region88: #{tpu_custom_call.1} parent=84 // loop_header_branch
                  %402 = sbr.rel (%p399) target = $region92
                $region89: #{tpu_custom_call.1} parent=84 // loop_body
                  %v406 = vld [vmem:[%s404] sm:$0xff]
                  %407 = vst [vmem:[%s405] sm:$0xff] %v406
                  %v408 = vld [vmem:[%s404 + $0x8] sm:$0xff]
                  %409 = vst [vmem:[%s405 + $0x8] sm:$0xff] %v408
                  %v410 = vld [vmem:[%s404 + $0x10] sm:$0xff]
                  %411 = vst [vmem:[%s405 + $0x10] sm:$0xff] %v410
                  %v412 = vld [vmem:[%s404 + $0x18] sm:$0xff]
                  %413 = vst [vmem:[%s405 + $0x18] sm:$0xff] %v412
                  %v414 = vld [vmem:[%s404 + $0x20] sm:$0xff]
                  %415 = vst [vmem:[%s405 + $0x20] sm:$0xff] %v414
                  %v416 = vld [vmem:[%s404 + $0x28] sm:$0xff]
                  %417 = vst [vmem:[%s405 + $0x28] sm:$0xff] %v416
                  %v418 = vld [vmem:[%s404 + $0x30] sm:$0xff]
                  %419 = vst [vmem:[%s405 + $0x30] sm:$0xff] %v418
                  %v420 = vld [vmem:[%s404 + $0x38] sm:$0xff]
                  %421 = vst [vmem:[%s405 + $0x38] sm:$0xff] %v420
                  %v422 = vld [vmem:[%s404 + $0x40] sm:$0xff]
                  %423 = vst [vmem:[%s405 + $0x40] sm:$0xff] %v422
                  %v424 = vld [vmem:[%s404 + $0x48] sm:$0xff]
                  %425 = vst [vmem:[%s405 + $0x48] sm:$0xff] %v424
                  %v426 = vld [vmem:[%s404 + $0x50] sm:$0xff]
                  %427 = vst [vmem:[%s405 + $0x50] sm:$0xff] %v426
                  %v428 = vld [vmem:[%s404 + $0x58] sm:$0xff]
                  %429 = vst [vmem:[%s405 + $0x58] sm:$0xff] %v428
                  %v430 = vld [vmem:[%s404 + $0x60] sm:$0xff]
                  %431 = vst [vmem:[%s405 + $0x60] sm:$0xff] %v430
                  %v432 = vld [vmem:[%s404 + $0x68] sm:$0xff]
                  %433 = vst [vmem:[%s405 + $0x68] sm:$0xff] %v432
                  %v434 = vld [vmem:[%s404 + $0x70] sm:$0xff]
                  %435 = vst [vmem:[%s405 + $0x70] sm:$0xff] %v434
                  %v436 = vld [vmem:[%s404 + $0x78] sm:$0xff]
                  %437 = vst [vmem:[%s405 + $0x78] sm:$0xff] %v436
                  %v438 = vld [vmem:[%s404 + $0x18] sm:$0xff]
                  %439 = vst [vmem:[%s405 + $0x10] sm:$0xff] %v438
                  %v440 = vld [vmem:[%s404 + $0x20] sm:$0xff]
                  %441 = vst [vmem:[%s405 + $0x18] sm:$0xff] %v440
                  %v442 = vld [vmem:[%s404 + $0x28] sm:$0xff]
                  %443 = vst [vmem:[%s405 + $0x20] sm:$0xff] %v442
                  %v444 = vld [vmem:[%s404 + $0x30] sm:$0xff]
                  %445 = vst [vmem:[%s405 + $0x28] sm:$0xff] %v444
                  %v446 = vld [vmem:[%s404 + $0x38] sm:$0xff]
                  %447 = vst [vmem:[%s405 + $0x30] sm:$0xff] %v446
                  %v448 = vld [vmem:[%s404 + $0x40] sm:$0xff]
                  %449 = vst [vmem:[%s405 + $0x38] sm:$0xff] %v448
                  %v450 = vld [vmem:[%s404 + $0x48] sm:$0xff]
                  %451 = vst [vmem:[%s405 + $0x40] sm:$0xff] %v450
                  %v452 = vld [vmem:[%s404 + $0x50] sm:$0xff]
                  %453 = vst [vmem:[%s405 + $0x48] sm:$0xff] %v452
                  %v454 = vld [vmem:[%s404 + $0x58] sm:$0xff]
                  %455 = vst [vmem:[%s405 + $0x50] sm:$0xff] %v454
                  %v456 = vld [vmem:[%s404 + $0x60] sm:$0xff]
                  %457 = vst [vmem:[%s405 + $0x58] sm:$0xff] %v456
                  %v458 = vld [vmem:[%s404 + $0x68] sm:$0xff]
                  %459 = vst [vmem:[%s405 + $0x60] sm:$0xff] %v458
                  %v460 = vld [vmem:[%s404 + $0x70] sm:$0xff]
                  %461 = vst [vmem:[%s405 + $0x68] sm:$0xff] %v460
                  %v462 = vld [vmem:[%s404 + $0x78] sm:$0xff]
                  %463 = vst [vmem:[%s405 + $0x70] sm:$0xff] %v462
                  %v464 = vld [vmem:[%s404 + $0x80] sm:$0xff]
                  %465 = vst [vmem:[%s405 + $0x78] sm:$0xff] %v464
                  %v466 = vld [vmem:[%s404 + $0x88] sm:$0xff]
                  %467 = vst [vmem:[%s405 + $0x80] sm:$0xff] %v466
                  %v468 = vld [vmem:[%s404 + $0x90] sm:$0xff]
                  %469 = vst [vmem:[%s405 + $0x88] sm:$0xff] %v468
                  %s470 = sadd.s32 1, %s403
                  %p471 = scmp.ge.s32.totalorder %s470, %s396
                  %s472 = scalar_select %p471, 0, %s470
                  %s473 = smul.u32 %s472, 128
                  %s474 = smul.u32 %s472, 128
                  %s475 = scalar_lea.vmem %s247, %s473
                  %s476 = scalar_lea.vmem %s239, %s474 [#allocation3]
                $region90: #{tpu_custom_call.1} parent=84 // loop_footer
                  %s400 = sadd.s32 %s398, 1
                $region91: #{tpu_custom_call.1} parent=84 // loop_footer_branch
                  %397 = sbr.rel target = $region87
                $region92: #{tpu_custom_call.1} parent=84 // loop_exit
                  _
                %s477 = sshrl.u32 %s395, 4
                %s478 = sand.u32 %s395, 15
                %s479 = smul.u32 %s477, 16
                %s480 = smul.u32 8, %s479
                %s481 = scalar_lea.vmem %s247, %s480
                %s482 = smul.u32 8, %s479
                %s483 = scalar_lea.vmem %s239, %s482 [#allocation3]
                // While loop
                $region93: #{tpu_custom_call.1} parent=84 // loop_pre_header
                  _
                $region94: #{tpu_custom_call.1} parent=84 // loop_header
                  %s485 = sphi 0, %s487
                  %p486 = scmp.ge.s32.totalorder %s485, %s478
                  %s490 = sphi 0, %s499
                  %s491 = sphi %s481, %s502
                  %s492 = sphi %s483, %s503
                $region95: #{tpu_custom_call.1} parent=84 // loop_header_branch
                  %489 = sbr.rel (%p486) target = $region99
                $region96: #{tpu_custom_call.1} parent=84 // loop_body
                  %v493 = vld [vmem:[%s491] sm:$0xff]
                  %494 = vst [vmem:[%s492] sm:$0xff] %v493
                  %v495 = vld [vmem:[%s491 + $0x18] sm:$0xff]
                  %496 = vst [vmem:[%s492 + $0x10] sm:$0xff] %v495
                  %s497 = sadd.s32 1, %s490
                  %p498 = scmp.ge.s32.totalorder %s497, %s478
                  %s499 = scalar_select %p498, 0, %s497
                  %s500 = smul.u32 %s499, 8
                  %s501 = smul.u32 %s499, 8
                  %s502 = scalar_lea.vmem %s481, %s500
                  %s503 = scalar_lea.vmem %s483, %s501 [#allocation3]
                $region97: #{tpu_custom_call.1} parent=84 // loop_footer
                  %s487 = sadd.s32 %s485, 1
                $region98: #{tpu_custom_call.1} parent=84 // loop_footer_branch
                  %484 = sbr.rel target = $region94
                $region99: #{tpu_custom_call.1} parent=84 // loop_exit
                  _
                %s504 = sshll.u32 1, %s390
                %s505 = ssub.s32 %s504, 1
                loop: start=0, step=1, limit=1
                $region100: #{tpu_custom_call.1} parent=84 // loop_pre_header
                  _
                $region101: #{tpu_custom_call.1} parent=84 // loop_header
                  %s507 = sphi 0, %s511
                  %p508 = scmp.ge.s32.totalorder %s507, 1
                  %s512 = sphi %s392, %s392
                  %s513 = sphi %s394, %s394
                $region102: #{tpu_custom_call.1} parent=84 // loop_header_branch
                  %510 = sbr.rel (%p508) target = $region106
                $region103: #{tpu_custom_call.1} parent=84 // loop_body
                  %v514 = vld [vmem:[%s512] sm:%s505]
                  %515 = vst [vmem:[%s513] sm:%s505] %v514
                  %v516 = vld [vmem:[%s512 + $0x18] sm:%s505]
                  %517 = vst [vmem:[%s513 + $0x10] sm:%s505] %v516
                $region104: #{tpu_custom_call.1} parent=84 // loop_footer
                  %s511 = sadd.s32 1, %s507
                $region105: #{tpu_custom_call.1} parent=84 // loop_footer_branch
                  %506 = sbr.rel target = $region101
                $region106: #{tpu_custom_call.1} parent=84 // loop_exit
                  _
              $region85: #{tpu_custom_call.1} parent=51 // pred_fallthru
                _
            $region52: #{tpu_custom_call.1} parent=47 // pred_fallthru
              _
            // Predicated region
            $region53: #{tpu_custom_call.1} parent=47 // pred_check
              %p256 = pneg %p252
            $region54: #{tpu_custom_call.1} parent=47 // pred_check_branch
              %258 = sbr.rel (%p256) target = $region56
            $region55: #{tpu_custom_call.1} parent=47 // pred_region
              %s259 = sshll.u32 1, %s248
              %s260 = ssub.s32 %s259, 1
              loop: start=0, step=1, limit=1
              $region57: #{tpu_custom_call.1} parent=55 // loop_pre_header
                _
              $region58: #{tpu_custom_call.1} parent=55 // loop_header
                %s262 = sphi 0, %s266
                %p263 = scmp.ge.s32.totalorder %s262, 1
                %s267 = sphi %s247, %s247
                %s268 = sphi %s239, %s239
              $region59: #{tpu_custom_call.1} parent=55 // loop_header_branch
                %265 = sbr.rel (%p263) target = $region63
              $region60: #{tpu_custom_call.1} parent=55 // loop_body
                %v269 = vld [vmem:[%s267] sm:%s260]
                %270 = vst [vmem:[%s268] sm:%s260] %v269
                %v271 = vld [vmem:[%s267 + $0x18] sm:%s260]
                %272 = vst [vmem:[%s268 + $0x10] sm:%s260] %v271
              $region61: #{tpu_custom_call.1} parent=55 // loop_footer
                %s266 = sadd.s32 1, %s262
              $region62: #{tpu_custom_call.1} parent=55 // loop_footer_branch
                %261 = sbr.rel target = $region58
              $region63: #{tpu_custom_call.1} parent=55 // loop_exit
                _
            $region56: #{tpu_custom_call.1} parent=47 // pred_fallthru
              _
          $region48: #{tpu_custom_call.1} parent=43 // pred_fallthru
            _
          %518 = vnop
        $region44: #{tpu_custom_call.1} parent=39 // pred_fallthru
          _
      $region40: #{tpu_custom_call.1} parent=5 // pred_fallthru
        _
      %p519 = scmp.le.s32.totalorder 1, %s18
      %p520 = scmp.lt.s32.totalorder %s18, 3
      %p521 = pnand %p519, %p520
      %p522 = pneg %p521
      // Predicated region
      $region107: #{tpu_custom_call.1} parent=5 // pred_check
        _
      $region108: #{tpu_custom_call.1} parent=5 // pred_check_branch
        %524 = sbr.rel (%p521) target = $region110
      $region109: #{tpu_custom_call.1} parent=5 // pred_region
        %s525 = ssub.s32 %s18, 1
        %s526 = sand.u32 %s31, 1
        %s527 = sand.u32 %s31, 1
        %s528 = smul.addr %s527, 32
        %s529 = scalar_lea.vmem [#allocation3], %s528
        // Predicated region
        $region111: #{tpu_custom_call.1} parent=109 // pred_check
          %p530 = pneg %p44
        $region112: #{tpu_custom_call.1} parent=109 // pred_check_branch
          %532 = sbr.rel (%p530) target = $region114
        $region113: #{tpu_custom_call.1} parent=109 // pred_region
          _
        $region114: #{tpu_custom_call.1} parent=109 // pred_fallthru
          _
        %s533 = sand.u32 %s31, 1
        %s534 = sand.u32 %s31, 1
        %s535 = smul.addr %s534, 32
        %s536 = scalar_lea.vmem [#allocation3], %s535
        %p537 = pneg %p44
        %p538 = pneg %p41
        %p539 = pneg %p65
        %p540 = pneg %p62
        %p541 = pneg %p86
        %p542 = pneg %p83
        %p543 = pneg %p107
        %p544 = pneg %p104
        %p545 = pneg %p128
        %p546 = pneg %p125
        %p547 = pneg %p149
        %p548 = pneg %p146
        %p549 = pneg %p170
        %p550 = pneg %p167
        %p551 = pneg %p196
        %p552 = pneg %p193
        %s553 = sand.u32 %s183, 1
        %s554 = scalar_lea.sflag [#allocation5], %s553
        %s555 = sand.u32 %s183, 1
        %s556 = smul.addr %s555, 2
        %s557 = scalar_lea.vmem [#allocation4], %s556
        %s558 = smul.u32 2, %s23
        %s559 = ssub.s32 3, %s558
        %p560 = scmp.lt.s32.totalorder %s559, 2
        %s561 = scalar_select %p560, %s559, 2
        %s562 = smul.u32 16, %s561
        %s563 = smul.u32 2, %s23
        %s564 = ssub.s32 3, %s563
        %p565 = scmp.lt.s32.totalorder %s564, 2
        %s566 = scalar_select %p565, %s564, 2
        %v567 = vld [vmem:[%s1] sm:$0xff]
        %v568 = vld [vmem:[%s1 + $0x8] sm:$0xff]
        %v569 = vld [vmem:[%s1 + $0x10] sm:$0xff]
        %v570 = vld [vmem:[%s1 + $0x18] sm:$0xff]
        %v571 = vld [vmem:[%s529] sm:$0xff]
        %v572 = vld [vmem:[%s529 + $0x8] sm:$0xff]
        %v573 = vld [vmem:[%s529 + $0x10] sm:$0xff]
        %v574 = vld [vmem:[%s529 + $0x18] sm:$0xff]
        %v575 = vld [vmem:[%s2] sm:$0xff]
        %v576 = vld [vmem:[%s2 + $0x8] sm:$0xff]
        %v577 = vld [vmem:[%s2 + $0x10] sm:$0xff]
        %v578 = vld [vmem:[%s2 + $0x18] sm:$0xff]
        %580 = vset.pattern.permute.xlu0 0
        %581 = vperm.xlu0 %580, %v575
        %v582 = vpop.permute.xlu0 %581
        %585 = vset.pattern.permute.xlu0 0
        %586 = vperm.xlu0 %585, %v576
        %v587 = vpop.permute.xlu0 %586
        %590 = vset.pattern.permute.xlu0 0
        %591 = vperm.xlu0 %590, %v577
        %v592 = vpop.permute.xlu0 %591
        %595 = vset.pattern.permute.xlu0 0
        %596 = vperm.xlu0 %595, %v578
        %v597 = vpop.permute.xlu0 %596
        %vm599 = vcmask 130048
        %v601 = vsel %vm599, %v567, 0
        %v604 = vsel %vm599, %v568, 0
        %v607 = vsel %vm599, %v569, 0
        %v610 = vsel %vm599, %v570, 0
        %612 = vmatpush.msra.mxu0 0.0
        %613 = vmatpush.msra.mxu0 0.0
        %614 = vmatpush.msra.mxu0 0.0
        %615 = vmatpush.msra.mxu0 0.0
        %616 = vmatpush.msra.mxu0 0.0
        %617 = vmatpush.msra.mxu0 0.0
        %618 = vmatpush.msra.mxu0 0.0
        %619 = vmatpush.msra.mxu0 0.0
        %620 = vmatpush.msra.mxu0 0.0
        %621 = vmatpush.msra.mxu0 0.0
        %622 = vmatpush.msra.mxu0 0.0
        %623 = vmatpush.msra.mxu0 0.0
        %624 = vmatpush.msra.mxu0 0.0
        %625 = vmatpush.msra.mxu0 0.0
        %626 = vmatpush.msra.mxu0 %v573
        %627 = vmatpush.msra.mxu0 %v571
        %628 = vmatmul.f32.gmra.mxu0 %v601
        %v629 = vpop.f32.mrf.mxu0
        %v630 = vadd.f32 %v582, %v629
        %631 = vmatmul.f32.gmra.mxu0 %v604
        %v632 = vpop.f32.mrf.mxu0
        %v633 = vadd.f32 %v587, %v632
        %634 = vmatmul.f32.gmra.mxu0 %v607
        %v635 = vpop.f32.mrf.mxu0
        %v636 = vadd.f32 %v592, %v635
        %637 = vmatmul.f32.gmra.mxu0 %v610
        %v638 = vpop.f32.mrf.mxu0
        %v639 = vadd.f32 %v597, %v638
        %640 = vdwg.mxu0
        %641 = vmatpush.msra.mxu0 0.0
        %642 = vmatpush.msra.mxu0 0.0
        %643 = vmatpush.msra.mxu0 0.0
        %644 = vmatpush.msra.mxu0 0.0
        %645 = vmatpush.msra.mxu0 0.0
        %646 = vmatpush.msra.mxu0 0.0
        %647 = vmatpush.msra.mxu0 0.0
        %648 = vmatpush.msra.mxu0 0.0
        %649 = vmatpush.msra.mxu0 0.0
        %650 = vmatpush.msra.mxu0 0.0
        %651 = vmatpush.msra.mxu0 0.0
        %652 = vmatpush.msra.mxu0 0.0
        %653 = vmatpush.msra.mxu0 0.0
        %654 = vmatpush.msra.mxu0 0.0
        %655 = vmatpush.msra.mxu0 %v574
        %656 = vmatpush.msra.mxu0 %v572
        %657 = vmatmul.f32.gmra.mxu0 %v601
        %v658 = vpop.f32.mrf.mxu0
        %v659 = vadd.f32 %v582, %v658
        %660 = vmatmul.f32.gmra.mxu0 %v604
        %v661 = vpop.f32.mrf.mxu0
        %v662 = vadd.f32 %v587, %v661
        %663 = vmatmul.f32.gmra.mxu0 %v607
        %v664 = vpop.f32.mrf.mxu0
        %v665 = vadd.f32 %v592, %v664
        %666 = vmatmul.f32.gmra.mxu0 %v610
        %v667 = vpop.f32.mrf.mxu0
        %v668 = vadd.f32 %v597, %v667
        %669 = vdwg.mxu0
        %v670 = vmax.f32 %v630, 0.0
        %v671 = vmax.f32 %v659, 0.0
        %v672 = vmax.f32 %v633, 0.0
        %v673 = vmax.f32 %v662, 0.0
        %v674 = vmax.f32 %v636, 0.0
        %v675 = vmax.f32 %v665, 0.0
        %v676 = vmax.f32 %v639, 0.0
        %v677 = vmax.f32 %v668, 0.0
        %v678 = vld [vmem:[%s3] sm:$0xff]
        %v679 = vld [vmem:[%s3 + $0x8] sm:$0xff]
        %v680 = vld [vmem:[%s3 + $0x10] sm:$0xff]
        %v681 = vld [vmem:[%s3 + $0x18] sm:$0xff]
        %v682 = vld [vmem:[%s4] sm:$0xff]
        %v683 = vld [vmem:[%s4 + $0x8] sm:$0xff]
        %v684 = vld [vmem:[%s4 + $0x10] sm:$0xff]
        %v685 = vld [vmem:[%s4 + $0x18] sm:$0xff]
        %687 = vset.pattern.permute.xlu0 0
        %688 = vperm.xlu0 %687, %v682
        %v689 = vpop.permute.xlu0 %688
        %692 = vset.pattern.permute.xlu0 0
        %693 = vperm.xlu0 %692, %v683
        %v694 = vpop.permute.xlu0 %693
        %697 = vset.pattern.permute.xlu0 0
        %698 = vperm.xlu0 %697, %v684
        %v699 = vpop.permute.xlu0 %698
        %702 = vset.pattern.permute.xlu0 0
        %703 = vperm.xlu0 %702, %v685
        %v704 = vpop.permute.xlu0 %703
        %vm706 = vcmask 261120
        %v708 = vsel %vm706, %v678, 0
        %v711 = vsel %vm706, %v679, 0
        %v714 = vsel %vm706, %v680, 0
        %v717 = vsel %vm706, %v681, 0
        %719 = vmatpush.msra.mxu0 0.0
        %720 = vmatpush.msra.mxu0 0.0
        %721 = vmatpush.msra.mxu0 0.0
        %722 = vmatpush.msra.mxu0 0.0
        %723 = vmatpush.msra.mxu0 0.0
        %724 = vmatpush.msra.mxu0 0.0
        %725 = vmatpush.msra.mxu0 0.0
        %726 = vmatpush.msra.mxu0 0.0
        %727 = vmatpush.msra.mxu0 0.0
        %728 = vmatpush.msra.mxu0 0.0
        %729 = vmatpush.msra.mxu0 0.0
        %730 = vmatpush.msra.mxu0 0.0
        %731 = vmatpush.msra.mxu0 %v676
        %732 = vmatpush.msra.mxu0 %v674
        %733 = vmatpush.msra.mxu0 %v672
        %734 = vmatpush.msra.mxu0 %v670
        %735 = vmatmul.f32.gmra.mxu0 %v708
        %v736 = vpop.f32.mrf.mxu0
        %v737 = vadd.f32 %v689, %v736
        %738 = vmatmul.f32.gmra.mxu0 %v711
        %v739 = vpop.f32.mrf.mxu0
        %v740 = vadd.f32 %v694, %v739
        %741 = vmatmul.f32.gmra.mxu0 %v714
        %v742 = vpop.f32.mrf.mxu0
        %v743 = vadd.f32 %v699, %v742
        %744 = vmatmul.f32.gmra.mxu0 %v717
        %v745 = vpop.f32.mrf.mxu0
        %v746 = vadd.f32 %v704, %v745
        %747 = vdwg.mxu0
        %748 = vmatpush.msra.mxu0 0.0
        %749 = vmatpush.msra.mxu0 0.0
        %750 = vmatpush.msra.mxu0 0.0
        %751 = vmatpush.msra.mxu0 0.0
        %752 = vmatpush.msra.mxu0 0.0
        %753 = vmatpush.msra.mxu0 0.0
        %754 = vmatpush.msra.mxu0 0.0
        %755 = vmatpush.msra.mxu0 0.0
        %756 = vmatpush.msra.mxu0 0.0
        %757 = vmatpush.msra.mxu0 0.0
        %758 = vmatpush.msra.mxu0 0.0
        %759 = vmatpush.msra.mxu0 0.0
        %760 = vmatpush.msra.mxu0 %v677
        %761 = vmatpush.msra.mxu0 %v675
        %762 = vmatpush.msra.mxu0 %v673
        %763 = vmatpush.msra.mxu0 %v671
        %764 = vmatmul.f32.gmra.mxu0 %v708
        %v765 = vpop.f32.mrf.mxu0
        %v766 = vadd.f32 %v689, %v765
        %767 = vmatmul.f32.gmra.mxu0 %v711
        %v768 = vpop.f32.mrf.mxu0
        %v769 = vadd.f32 %v694, %v768
        %770 = vmatmul.f32.gmra.mxu0 %v714
        %v771 = vpop.f32.mrf.mxu0
        %v772 = vadd.f32 %v699, %v771
        %773 = vmatmul.f32.gmra.mxu0 %v717
        %v774 = vpop.f32.mrf.mxu0
        %v775 = vadd.f32 %v704, %v774
        %776 = vdwg.mxu0
        %v777 = vmax.f32 %v737, 0.0
        %v778 = vmax.f32 %v766, 0.0
        %v779 = vmax.f32 %v740, 0.0
        %v780 = vmax.f32 %v769, 0.0
        %v781 = vmax.f32 %v743, 0.0
        %v782 = vmax.f32 %v772, 0.0
        %v783 = vmax.f32 %v746, 0.0
        %v784 = vmax.f32 %v775, 0.0
        %v785 = vld [vmem:[%s5] sm:$0xff]
        %v786 = vld [vmem:[%s5 + $0x8] sm:$0xff]
        %v787 = vld [vmem:[%s5 + $0x10] sm:$0xff]
        %v788 = vld [vmem:[%s5 + $0x18] sm:$0xff]
        %790 = vset.pattern.permute.xlu0 0
        %791 = vperm.xlu0 %790, %v785
        %v792 = vpop.permute.xlu0 %791
        %795 = vset.pattern.permute.xlu0 0
        %796 = vperm.xlu0 %795, %v786
        %v797 = vpop.permute.xlu0 %796
        %800 = vset.pattern.permute.xlu0 0
        %801 = vperm.xlu0 %800, %v787
        %v802 = vpop.permute.xlu0 %801
        %805 = vset.pattern.permute.xlu0 0
        %806 = vperm.xlu0 %805, %v788
        %v807 = vpop.permute.xlu0 %806
        %v809 = vmul.f32 %v777, %v792
        %v810 = vmul.f32 %v778, %v792
        %v811 = vmul.f32 %v779, %v797
        %v812 = vmul.f32 %v780, %v797
        %v813 = vmul.f32 %v781, %v802
        %v814 = vmul.f32 %v782, %v802
        %v815 = vmul.f32 %v783, %v807
        %v816 = vmul.f32 %v784, %v807
        %v817 = vadd.f32 %v809, %v811
        %v818 = vadd.f32 %v817, %v813
        %v819 = vadd.f32 %v818, %v815
        %v820 = vrot.slane %v819, 4
        %v821 = vadd.f32 %v819, %v820
        %v822 = vrot.slane %v821, 2
        %v823 = vadd.f32 %v821, %v822
        %v824 = vrot.slane %v823, 1
        %v825 = vadd.f32 %v823, %v824
        %v826 = vadd.f32 %v810, %v812
        %v827 = vadd.f32 %v826, %v814
        %v828 = vadd.f32 %v827, %v816
        %v829 = vrot.slane %v828, 4
        %v830 = vadd.f32 %v828, %v829
        %v831 = vrot.slane %v830, 2
        %v832 = vadd.f32 %v830, %v831
        %v833 = vrot.slane %v832, 1
        %v834 = vadd.f32 %v832, %v833
        %v835 = vld [vmem:[#allocation2] sm:$0x1]
        %837 = vset.pattern.permute.xlu0 0
        %838 = vperm.xlu0 %837, %v835
        %v839 = vpop.permute.xlu0 %838
        %v841 = vperm.slane %v839, 0
        %v842 = vadd.f32 %v825, %v841
        %v843 = vadd.f32 %v834, %v841
        %v844 = vxor.u32 %v842, 2147483648
        %v845 = vxor.u32 %v843, 2147483648
        %v846 = vmul.f32 %v844, 1.442695
        %v847 = vpow.pop %v846
        %v848 = vmul.f32 %v845, 1.442695
        %v849 = vpow.pop %v848
        %v850 = vadd.f32 %v847, 1.0
        %v851 = vadd.f32 %v849, 1.0
        %v852 = vrcp.pop %v850
        %v853 = vmul.f32 %v850, %v852
        %v854 = vsub.f32 1.0, %v853
        %v855 = vmul.f32 %v852, %v854
        %v856 = vadd.f32 %v852, %v855
        %vm857 = vweird.f32 %v850
        %vm858 = vweird.f32 %v852
        %vm859 = vmor %vm857, %vm858
        %v860 = vsel %vm859, %v852, %v856
        %v861 = vand.u32 2147483647, %v850
        %vm862 = vcmp.eq.f32.partialorder %v861, 8.507059e+37
        %v863 = vand.u32 %v850, 2147483648
        %v864 = vor.u32 1.1754944e-38, %v863
        %v865 = vsel %vm862, %v864, %v860
        %v866 = vmul.f32 1.0, %v865
        %v867 = vrcp.pop %v851
        %v868 = vmul.f32 %v851, %v867
        %v869 = vsub.f32 1.0, %v868
        %v870 = vmul.f32 %v867, %v869
        %v871 = vadd.f32 %v867, %v870
        %vm872 = vweird.f32 %v851
        %vm873 = vweird.f32 %v867
        %vm874 = vmor %vm872, %vm873
        %v875 = vsel %vm874, %v867, %v871
        %v876 = vand.u32 2147483647, %v851
        %vm877 = vcmp.eq.f32.partialorder %v876, 8.507059e+37
        %v878 = vand.u32 %v851, 2147483648
        %v879 = vor.u32 1.1754944e-38, %v878
        %v880 = vsel %vm877, %v879, %v875
        %v881 = vmul.f32 1.0, %v880
        %v884 = vrot.slane %v881, 7
        %vm885 = vcmask 1040384
        %v886 = vsel %vm885, %v866, %v884
        %v888 = vlaneseq
        %vm889 = vcmp.ge.s32.totalorder %v888, 0
        %vm890 = vcmp.lt.s32.totalorder %v888, 256
        %vm891 = vmand %vm889, %vm890
        %892 = vst.msk [vmem:[%s557] sm:$0x3] %vm891, %v886
        %s893 = sand.u32 %s183, 1
        %s894 = scalar_lea.sflag [#allocation5], %s893
        %s895 = sand.u32 %s183, 1
        %s896 = smul.addr %s895, 2
        %s897 = scalar_lea.vmem [#allocation4], %s896
        // Predicated region
        $region115: #{tpu_custom_call.1} parent=109 // pred_check
          %p898 = pneg %p193
        $region116: #{tpu_custom_call.1} parent=109 // pred_check_branch
          %900 = sbr.rel (%p898) target = $region118
        $region117: #{tpu_custom_call.1} parent=109 // pred_region
          %s901 = smul.u32 2, %s23
          %s902 = ssub.s32 3, %s901
          %p903 = scmp.lt.s32.totalorder %s902, 2
          %s904 = scalar_select %p903, %s902, 2
          %s905 = ssub.s32 2, %s904
          %s906 = sshll.u32 %s905, 4
          %907 = vsyncadd %s894, %s906
          %p908 = scmp.ne.s32.totalorder 0, %s904
          %s909 = scalar_lea.hbm %s7, %s901
          %s910 = sshll.u32 %s904, 4
          %s911 = sshll.u32 %s897, 4
          %s912 = int_to_ptr.vmem [resolvable:$true] %s911
          %s913 = sshll.u32 %s909, 4
          %s914 = int_to_ptr.hbm [resolvable:$true] %s913
          %916 = dma.vmem_to_hbm [thread:$0]  (%p908), %s912, %s910, %s914, %s894
        $region118: #{tpu_custom_call.1} parent=109 // pred_fallthru
          _
      $region110: #{tpu_custom_call.1} parent=5 // pred_fallthru
        _
      %p917 = scmp.le.s32.totalorder 2, %s18
      // Predicated region
      $region119: #{tpu_custom_call.1} parent=5 // pred_check
        %p918 = pneg %p917
      $region120: #{tpu_custom_call.1} parent=5 // pred_check_branch
        %920 = sbr.rel (%p918) target = $region122
      $region121: #{tpu_custom_call.1} parent=5 // pred_region
        %s921 = ssub.s32 %s18, 2
        // Predicated region
        $region123: #{tpu_custom_call.1} parent=121 // pred_check
          %p922 = pneg %p199
        $region124: #{tpu_custom_call.1} parent=121 // pred_check_branch
          %924 = sbr.rel (%p922) target = $region126
        $region125: #{tpu_custom_call.1} parent=121 // pred_region
          %s925 = sand.u32 %s184, 1
          %s926 = scalar_lea.sflag [#allocation5], %s925
          %s927 = sand.u32 %s184, 1
          %s928 = smul.addr %s927, 2
          %s929 = scalar_lea.vmem [#allocation4], %s928
          %931 = dma.done %s926, 32
        $region126: #{tpu_custom_call.1} parent=121 // pred_fallthru
          _
      $region122: #{tpu_custom_call.1} parent=5 // pred_fallthru
        _
    $region6: #{tpu_custom_call.1} parent=1 // loop_footer
      %s22 = sadd.s32 1, %s18
    $region7: #{tpu_custom_call.1} parent=1 // loop_footer_branch
      %17 = sbr.rel target = $region3
    $region8: #{tpu_custom_call.1} parent=1 // loop_exit
      _
    %932 = vsyncpa [#allocation5], 1
    %s933 = scalar_lea.sflag [#allocation5], 1
    %934 = vsyncpa %s933, 1

</llo_original>
